<compile_context>
chip_gen: v6e
topology: v6e:2x2x1
jax: 0.10.0
libtpu: 0.0.40
codegen_flags: <defaults>
</compile_context>

<pallas_src>
import functools

import jax
import jax.numpy as jnp
from jax import lax
from jax.experimental import pallas as pl
from jax.experimental.pallas import tpu as pltpu


# ---------------------------------------------------------------------------
# Pallas kernel
# ---------------------------------------------------------------------------
def _make_kernel(reg_type: str):
    def kernel(d_ref, out_ref):
        x = d_ref[...].astype(jnp.float32)          # (D, H, W)
        D, H, W = x.shape

        # Circular shifts along sublane (H) / lane (W) axes on the XLU.
        # Positive-only shift amounts (mod dim) avoid any ambiguity.
        def rh(v, s):
            return pltpu.roll(v, shift=s % H, axis=1)

        def rw(v, s):
            return pltpu.roll(v, shift=s % W, axis=2)

        if reg_type == "bending":
            border = 2
            xc = x[2:-2]                            # centre slab (D-4, H, W)
            dxx = (x[4:] + x[:-4] - 2.0 * xc) * 0.25
            acc = dxx * dxx
            dyy = (rh(xc, 2) + rh(xc, -2) - 2.0 * xc) * 0.25
            acc = acc + dyy * dyy
            dzz = (rw(xc, 2) + rw(xc, -2) - 2.0 * xc) * 0.25
            acc = acc + dzz * dzz
            dd = x[3:-1] - x[1:-3]                  # x[d+1] - x[d-1]
            dxy = (rh(dd, 1) - rh(dd, -1)) * 0.25
            acc = acc + 2.0 * (dxy * dxy)
            dxz = (rw(dd, 1) - rw(dd, -1)) * 0.25
            acc = acc + 2.0 * (dxz * dxz)
            hd = rh(xc, 1) - rh(xc, -1)             # x[., h+1, .] - x[., h-1, .]
            dyz = (rw(hd, 1) - rw(hd, -1)) * 0.25
            acc = acc + 2.0 * (dyz * dyz)
        else:
            border = 1
            xc = x[1:-1]                            # (D-2, H, W)
            dx = (x[2:] - x[:-2]) * 0.5             # D slices: free addressing
            dy = (rh(xc, 1) - rh(xc, -1)) * 0.5
            dz = (rw(xc, 1) - rw(xc, -1)) * 0.5
            if reg_type == "gradient-l2":
                acc = dx * dx + dy * dy + dz * dz
            else:  # gradient-l1
                acc = jnp.abs(dx) + jnp.abs(dy) + jnp.abs(dz)

        # Per-lane partial sums: reduce over leading (D) axis only (VPU adds),
        # then zero the H/W halo once. No cross-lane XLU reduction in-kernel;
        # the tiny (H, W) slab is summed in the wrapper.
        s_hw = jnp.sum(acc, axis=0)                 # (H, W)
        hh = lax.broadcasted_iota(jnp.int32, (H, W), 0)
        ww = lax.broadcasted_iota(jnp.int32, (H, W), 1)
        valid = ((hh >= border) & (hh <= H - 1 - border)
                 & (ww >= border) & (ww <= W - 1 - border))
        out_ref[...] = jnp.where(valid, s_hw, 0.0)

    return kernel


def _vmem_limit_bytes() -> int:
    cap = 128 * 1024 * 1024
    try:
        cap = int(pltpu.get_tpu_info().vmem_capacity_bytes)
    except Exception:
        pass  # conservative fallback if the query is unavailable
    # 48 MiB on 128-MiB parts (v5e/v6e); 32 MiB on v7x's 64 MiB.
    return min(48 * 1024 * 1024, cap // 2)


# ---------------------------------------------------------------------------
# Wrapper
# ---------------------------------------------------------------------------
@functools.partial(jax.jit, static_argnames=("reg_type",))
def displacement_regularizer_3d(displacement, reg_type: str):
    """displacement: (B, 3, D, H, W). Returns scalar f32 regulariser.

    Layout: W maps to the 128-wide lane axis, H to sublanes — put the largest
    spatial extent last (multiple of 128 if possible). bf16 inputs accepted.
    """
    if reg_type not in ("bending", "gradient-l2", "gradient-l1"):
        raise ValueError("Unknown displacement regulariser!")

    B, C, D, H, W = displacement.shape
    min_dim = 5 if reg_type == "bending" else 3
    if min(D, H, W) < min_dim:
        raise ValueError(f"'{reg_type}' requires every spatial dim >= {min_dim}")

    partial = pl.pallas_call(
        _make_kernel(reg_type),
        out_shape=jax.ShapeDtypeStruct((B, C, H, W), jnp.float32),
        grid=(B, C),
        in_specs=[
            pl.BlockSpec((None, None, D, H, W), lambda b, c: (b, c, 0, 0, 0)),
        ],
        out_specs=pl.BlockSpec((None, None, H, W), lambda b, c: (b, c, 0, 0)),
        compiler_params=pltpu.CompilerParams(
            dimension_semantics=("parallel", "parallel"),
            vmem_limit_bytes=_vmem_limit_bytes(),
        ),
    )(displacement)

    total = jnp.sum(partial)
    if reg_type == "bending":
        count = B * C * (D - 4) * (H - 4) * (W - 4)
        return total / count
    count = B * C * (D - 2) * (H - 2) * (W - 2)
    return total / count / 3.0


# ---------------------------------------------------------------------------
# Pure-JAX reference (mirrors the PyTorch module exactly)
# ---------------------------------------------------------------------------
def _grad_dx(fv):
    return (fv[:, 2:, 1:-1, 1:-1] - fv[:, :-2, 1:-1, 1:-1]) / 2


def _grad_dy(fv):
    return (fv[:, 1:-1, 2:, 1:-1] - fv[:, 1:-1, :-2, 1:-1]) / 2


def _grad_dz(fv):
    return (fv[:, 1:-1, 1:-1, 2:] - fv[:, 1:-1, 1:-1, :-2]) / 2


def _apply_grad(disp, fn):
    return jnp.stack([fn(disp[:, i]) for i in range(3)], axis=1)


def _reference(displacement, reg_type):
    d = displacement.astype(jnp.float32)
    dTdx = _apply_grad(d, _grad_dx)
    dTdy = _apply_grad(d, _grad_dy)
    dTdz = _apply_grad(d, _grad_dz)
    if reg_type == "bending":
        dTdxx = _apply_grad(dTdx, _grad_dx)
        dTdyy = _apply_grad(dTdy, _grad_dy)
        dTdzz = _apply_grad(dTdz, _grad_dz)
        dTdxy = _apply_grad(dTdx, _grad_dy)
        dTdyz = _apply_grad(dTdy, _grad_dz)
        dTdxz = _apply_grad(dTdx, _grad_dz)
        return jnp.mean(dTdxx ** 2 + dTdyy ** 2 + dTdzz ** 2
                        + 2 * dTdxy ** 2 + 2 * dTdxz ** 2 + 2 * dTdyz ** 2)
    elif reg_type == "gradient-l2":
        return jnp.mean(dTdx ** 2 + dTdy ** 2 + dTdz ** 2) / 3.0
    elif reg_type == "gradient-l1":
        return jnp.mean(jnp.abs(dTdx) + jnp.abs(dTdy) + jnp.abs(dTdz)) / 3.0
    raise ValueError(reg_type)


if __name__ == "__main__":
    key = jax.random.PRNGKey(0)
    # (batch, 3 displacement components, D, H, W); W on the lane axis.
    B, C, D, H, W = 2, 3, 8, 16, 128
    displacement = jax.random.normal(key, (B, C, D, H, W), dtype=jnp.float32)

    for reg_type in ("bending", "gradient-l2", "gradient-l1"):
        got = jax.block_until_ready(displacement_regularizer_3d(displacement, reg_type))
        want = jax.block_until_ready(_reference(displacement, reg_type))
        assert jnp.allclose(got, want, rtol=1e-4, atol=1e-5), (reg_type, got, want)

    print("KERNEL_OK")
</pallas_src>

<mosaic_0001>
module attributes {stable_mosaic.version = 11 : i64} {
  func.func @kernel(%arg0: i32, %arg1: i32, %arg2: memref<1x1x8x16x128xf32, #tpu.memory_space<vmem>>, %arg3: memref<1x1x16x128xf32, #tpu.memory_space<vmem>>) attributes {dimension_semantics = [#tpu.dimension_semantics<parallel>, #tpu.dimension_semantics<parallel>], iteration_bounds = array<i64: 2, 3>, scalar_prefetch = 0 : i64, scratch_operands = 0 : i64, tpu.core_type = #tpu.core_type<tc>, window_params = [{transform_indices = @transform_0, window_bounds = array<i64: 1, 1, 8, 16, 128>}, {transform_indices = @transform_1, window_bounds = array<i64: 1, 1, 16, 128>}]} {
    %c0 = arith.constant 0 : index
    %c0_0 = arith.constant 0 : index
    %c0_1 = arith.constant 0 : index
    %c0_2 = arith.constant 0 : index
    %c0_3 = arith.constant 0 : index
    %0 = vector.load %arg2[%c0, %c0_0, %c0_1, %c0_2, %c0_3] : memref<1x1x8x16x128xf32, #tpu.memory_space<vmem>>, vector<1x1x8x16x128xf32>
    %1 = vector.shape_cast %0 : vector<1x1x8x16x128xf32> to vector<8x16x128xf32>
    %2 = vector.extract_strided_slice %1 {offsets = [2, 0, 0], sizes = [4, 16, 128], strides = [1, 1, 1]} : vector<8x16x128xf32> to vector<4x16x128xf32>
    %3 = vector.extract_strided_slice %1 {offsets = [4, 0, 0], sizes = [4, 16, 128], strides = [1, 1, 1]} : vector<8x16x128xf32> to vector<4x16x128xf32>
    %4 = vector.extract_strided_slice %1 {offsets = [0, 0, 0], sizes = [4, 16, 128], strides = [1, 1, 1]} : vector<8x16x128xf32> to vector<4x16x128xf32>
    %5 = arith.addf %3, %4 : vector<4x16x128xf32>
    %cst = arith.constant 2.000000e+00 : f32
    %6 = vector.broadcast %cst : f32 to vector<4x16x128xf32>
    %7 = arith.mulf %6, %2 : vector<4x16x128xf32>
    %8 = arith.subf %5, %7 : vector<4x16x128xf32>
    %cst_4 = arith.constant 2.500000e-01 : f32
    %9 = vector.broadcast %cst_4 : f32 to vector<4x16x128xf32>
    %10 = arith.mulf %8, %9 : vector<4x16x128xf32>
    %11 = arith.mulf %10, %10 : vector<4x16x128xf32>
    %c2_i32 = arith.constant 2 : i32
    %12 = tpu.dynamic_rotate %2 by %c2_i32 dim 1 : vector<4x16x128xf32>, i32 -> vector<4x16x128xf32>
    %c14_i32 = arith.constant 14 : i32
    %13 = tpu.dynamic_rotate %2 by %c14_i32 dim 1 : vector<4x16x128xf32>, i32 -> vector<4x16x128xf32>
    %14 = arith.addf %12, %13 : vector<4x16x128xf32>
    %cst_5 = arith.constant 2.000000e+00 : f32
    %15 = vector.broadcast %cst_5 : f32 to vector<4x16x128xf32>
    %16 = arith.mulf %15, %2 : vector<4x16x128xf32>
    %17 = arith.subf %14, %16 : vector<4x16x128xf32>
    %cst_6 = arith.constant 2.500000e-01 : f32
    %18 = vector.broadcast %cst_6 : f32 to vector<4x16x128xf32>
    %19 = arith.mulf %17, %18 : vector<4x16x128xf32>
    %20 = arith.mulf %19, %19 : vector<4x16x128xf32>
    %21 = arith.addf %11, %20 : vector<4x16x128xf32>
    %c2_i32_7 = arith.constant 2 : i32
    %22 = tpu.dynamic_rotate %2 by %c2_i32_7 dim 2 : vector<4x16x128xf32>, i32 -> vector<4x16x128xf32>
    %c126_i32 = arith.constant 126 : i32
    %23 = tpu.dynamic_rotate %2 by %c126_i32 dim 2 : vector<4x16x128xf32>, i32 -> vector<4x16x128xf32>
    %24 = arith.addf %22, %23 : vector<4x16x128xf32>
    %cst_8 = arith.constant 2.000000e+00 : f32
    %25 = vector.broadcast %cst_8 : f32 to vector<4x16x128xf32>
    %26 = arith.mulf %25, %2 : vector<4x16x128xf32>
    %27 = arith.subf %24, %26 : vector<4x16x128xf32>
    %cst_9 = arith.constant 2.500000e-01 : f32
    %28 = vector.broadcast %cst_9 : f32 to vector<4x16x128xf32>
    %29 = arith.mulf %27, %28 : vector<4x16x128xf32>
    %30 = arith.mulf %29, %29 : vector<4x16x128xf32>
    %31 = arith.addf %21, %30 : vector<4x16x128xf32>
    %32 = vector.extract_strided_slice %1 {offsets = [3, 0, 0], sizes = [4, 16, 128], strides = [1, 1, 1]} : vector<8x16x128xf32> to vector<4x16x128xf32>
    %33 = vector.extract_strided_slice %1 {offsets = [1, 0, 0], sizes = [4, 16, 128], strides = [1, 1, 1]} : vector<8x16x128xf32> to vector<4x16x128xf32>
    %34 = arith.subf %32, %33 : vector<4x16x128xf32>
    %c1_i32 = arith.constant 1 : i32
    %35 = tpu.dynamic_rotate %34 by %c1_i32 dim 1 : vector<4x16x128xf32>, i32 -> vector<4x16x128xf32>
    %c15_i32 = arith.constant 15 : i32
    %36 = tpu.dynamic_rotate %34 by %c15_i32 dim 1 : vector<4x16x128xf32>, i32 -> vector<4x16x128xf32>
    %37 = arith.subf %35, %36 : vector<4x16x128xf32>
    %cst_10 = arith.constant 2.500000e-01 : f32
    %38 = vector.broadcast %cst_10 : f32 to vector<4x16x128xf32>
    %39 = arith.mulf %37, %38 : vector<4x16x128xf32>
    %40 = arith.mulf %39, %39 : vector<4x16x128xf32>
    %cst_11 = arith.constant 2.000000e+00 : f32
    %41 = vector.broadcast %cst_11 : f32 to vector<4x16x128xf32>
    %42 = arith.mulf %41, %40 : vector<4x16x128xf32>
    %43 = arith.addf %31, %42 : vector<4x16x128xf32>
    %c1_i32_12 = arith.constant 1 : i32
    %44 = tpu.dynamic_rotate %34 by %c1_i32_12 dim 2 : vector<4x16x128xf32>, i32 -> vector<4x16x128xf32>
    %c127_i32 = arith.constant 127 : i32
    %45 = tpu.dynamic_rotate %34 by %c127_i32 dim 2 : vector<4x16x128xf32>, i32 -> vector<4x16x128xf32>
    %46 = arith.subf %44, %45 : vector<4x16x128xf32>
    %cst_13 = arith.constant 2.500000e-01 : f32
    %47 = vector.broadcast %cst_13 : f32 to vector<4x16x128xf32>
    %48 = arith.mulf %46, %47 : vector<4x16x128xf32>
    %49 = arith.mulf %48, %48 : vector<4x16x128xf32>
    %cst_14 = arith.constant 2.000000e+00 : f32
    %50 = vector.broadcast %cst_14 : f32 to vector<4x16x128xf32>
    %51 = arith.mulf %50, %49 : vector<4x16x128xf32>
    %52 = arith.addf %43, %51 : vector<4x16x128xf32>
    %c1_i32_15 = arith.constant 1 : i32
    %53 = tpu.dynamic_rotate %2 by %c1_i32_15 dim 1 : vector<4x16x128xf32>, i32 -> vector<4x16x128xf32>
    %c15_i32_16 = arith.constant 15 : i32
    %54 = tpu.dynamic_rotate %2 by %c15_i32_16 dim 1 : vector<4x16x128xf32>, i32 -> vector<4x16x128xf32>
    %55 = arith.subf %53, %54 : vector<4x16x128xf32>
    %c1_i32_17 = arith.constant 1 : i32
    %56 = tpu.dynamic_rotate %55 by %c1_i32_17 dim 2 : vector<4x16x128xf32>, i32 -> vector<4x16x128xf32>
    %c127_i32_18 = arith.constant 127 : i32
    %57 = tpu.dynamic_rotate %55 by %c127_i32_18 dim 2 : vector<4x16x128xf32>, i32 -> vector<4x16x128xf32>
    %58 = arith.subf %56, %57 : vector<4x16x128xf32>
    %cst_19 = arith.constant 2.500000e-01 : f32
    %59 = vector.broadcast %cst_19 : f32 to vector<4x16x128xf32>
    %60 = arith.mulf %58, %59 : vector<4x16x128xf32>
    %61 = arith.mulf %60, %60 : vector<4x16x128xf32>
    %cst_20 = arith.constant 2.000000e+00 : f32
    %62 = vector.broadcast %cst_20 : f32 to vector<4x16x128xf32>
    %63 = arith.mulf %62, %61 : vector<4x16x128xf32>
    %64 = arith.addf %52, %63 : vector<4x16x128xf32>
    %cst_21 = arith.constant dense<0.000000e+00> : vector<16x128xf32>
    %65 = vector.multi_reduction <add>, %64, %cst_21 [0] : vector<4x16x128xf32> to vector<16x128xf32>
    %66 = tpu.iota {dimensions = array<i32: 0>} : vector<16x128xi32>
    %67 = tpu.iota {dimensions = array<i32: 1>} : vector<16x128xi32>
    %c2_i32_22 = arith.constant 2 : i32
    %68 = vector.broadcast %c2_i32_22 : i32 to vector<16x128xi32>
    %69 = arith.cmpi sge, %66, %68 : vector<16x128xi32>
    %c13_i32 = arith.constant 13 : i32
    %70 = vector.broadcast %c13_i32 : i32 to vector<16x128xi32>
    %71 = arith.cmpi sle, %66, %70 : vector<16x128xi32>
    %72 = arith.andi %69, %71 : vector<16x128xi1>
    %c2_i32_23 = arith.constant 2 : i32
    %73 = vector.broadcast %c2_i32_23 : i32 to vector<16x128xi32>
    %74 = arith.cmpi sge, %67, %73 : vector<16x128xi32>
    %75 = arith.andi %72, %74 : vector<16x128xi1>
    %c125_i32 = arith.constant 125 : i32
    %76 = vector.broadcast %c125_i32 : i32 to vector<16x128xi32>
    %77 = arith.cmpi sle, %67, %76 : vector<16x128xi32>
    %78 = arith.andi %75, %77 : vector<16x128xi1>
    %cst_24 = arith.constant 0.000000e+00 : f32
    %79 = vector.broadcast %cst_24 : f32 to vector<16x128xf32>
    %80 = arith.select %78, %65, %79 : vector<16x128xi1>, vector<16x128xf32>
    %c0_25 = arith.constant 0 : index
    %c0_26 = arith.constant 0 : index
    %c0_27 = arith.constant 0 : index
    %c0_28 = arith.constant 0 : index
    %81 = vector.load %arg3[%c0_25, %c0_26, %c0_27, %c0_28] : memref<1x1x16x128xf32, #tpu.memory_space<vmem>>, vector<1x1x16x128xf32>
    %82 = vector.shape_cast %81 : vector<1x1x16x128xf32> to vector<16x128xf32>
    %83 = vector.shape_cast %80 : vector<16x128xf32> to vector<1x1x16x128xf32>
    tpu.vector_store %arg3[%c0_25, %c0_26, %c0_27, %c0_28], %83 {strides = array<i32>} : memref<1x1x16x128xf32, #tpu.memory_space<vmem>>, vector<1x1x16x128xf32>,
    return
  }
  func.func @transform_0(%arg0: i32, %arg1: i32) -> (i32, i32, i32, i32, i32) {
    %c0_i32 = arith.constant 0 : i32
    %c0_i32_0 = arith.constant 0 : i32
    %c0_i32_1 = arith.constant 0 : i32
    %c0_i32_2 = arith.constant 0 : i32
    return %arg0, %arg1, %c0_i32, %c0_i32_0, %c0_i32_1 : i32, i32, i32, i32, i32
  }
  func.func @transform_1(%arg0: i32, %arg1: i32) -> (i32, i32, i32, i32) {
    %c0_i32 = arith.constant 0 : i32
    %c0_i32_0 = arith.constant 0 : i32
    %c0_i32_1 = arith.constant 0 : i32
    return %arg0, %arg1, %c0_i32, %c0_i32_0 : i32, i32, i32, i32
  }
}

</mosaic_0001>

<llo_original>
// kernel: displacement_regularizer_3d.1
$region0: #{displacement_regularizer_3d.1}
  #allocation0 [shape = 'u32[]', space=smem, size = 0x4, offset = 0x4, fixed_abs, tag = 'smem constant byte address 0x4 - core index']
  #allocation1 [shape = 'u32[144,128]{1,0:T(1,128)}', space=vmem, size = 0x12000, scoped, tag = 'internal scratch']
  %s0 = inlined_call_operand.hbm [shape: f32[2,3,8,16,128], index: 0, kind: input, shape index: {}]
  %s1 = inlined_call_operand.vmem [shape: f32[2,3,16,128], index: 1, kind: output, shape index: {}]
  %s2 = sld [smem:[#allocation0]]
  $region41: #{displacement_regularizer_3d.1} parent=0
    _
  %s4 = ssub.s32 1, %s2
  %s5 = scalar_select 0, %s4, %s2
  $region1: #{displacement_regularizer_3d.1} parent=0
    #allocation2 [shape = 'u8[131072]{0}', space=vmem, size = 0x20000, scoped, tag = 'input window, operand 0']
    #allocation3 [shape = 's32[2]{0}', space=sflag, size = 0x8, scoped, tag = 'scoped memory for displacement_regularizer_3d.1']
    %6 = vsyncpa [#allocation3], 0
    %s7 = scalar_lea.sflag [#allocation3], 1
    %8 = vsyncpa %s7, 0
    loop: start=0, step=1, limit=8
    $region2: #{displacement_regularizer_3d.1} parent=1 // loop_pre_header
      _
    $region3: #{displacement_regularizer_3d.1} parent=1 // loop_header
      %s10 = sphi 0, %s14
      %p11 = scmp.ge.s32.totalorder %s10, 8
      %s17 = sphi 0, %s29
      %s18 = sphi 0, %s25
      %s19 = sphi 0, %s17
      %s20 = sphi 0, %s18
      %s21 = sphi 0, %s19
      %s22 = sphi 0, %s20
      %s34 = sphi 0, %s36
      %s37 = sphi 0, %s34
      %s38 = sphi 0, %s37
      %s54 = sphi 0, %s38
      %s62 = sphi 0, %s64
      %s65 = sphi 0, %s62
      %s66 = sphi 0, %s65
      %s82 = sphi 0, %s66
    $region4: #{displacement_regularizer_3d.1} parent=1 // loop_header_branch
      %13 = sbr.rel (%p11) target = $region8
    $region5: #{displacement_regularizer_3d.1} parent=1 // loop_body
      %s15 = ssub.s32 %s10, 1
      %s16 = ssub.s32 %s10, 2
      %s23 = sadd.s32 1, %s18
      %p24 = scmp.ge.s32.totalorder %s23, 3
      %s25 = scalar_select %p24, 0, %s23
      %s26 = sadd.s32 1, %s17
      %s27 = scalar_select %p24, %s26, %s17
      %p28 = scmp.ge.s32.totalorder %s27, 2
      %s29 = scalar_select %p28, 0, %s27
      %s30 = ssub.s32 %s17, %s29
      %s31 = ssub.s32 %s18, %s25
      %s32 = sor.u32 %s30, %s31
      %p33 = scmp.eq.s32.totalorder %s32, 0
      %s35 = sadd.s32 %s34, 1
      %s36 = scalar_select %p33, %s34, %s35
      %p39 = pneg %p33
      %p40 = scmp.eq.s32.totalorder %s10, 5
      %p41 = por %p39, %p40
      %p42 = scmp.ne.s32.totalorder %s34, %s37
      %p43 = scmp.eq.s32.totalorder %s10, 0
      %p44 = por %p42, %p43
      %p45 = scmp.ne.s32.totalorder %s34, %s37
      %p46 = scmp.eq.s32.totalorder %s15, 5
      %p47 = por %p45, %p46
      %p48 = scmp.ne.s32.totalorder %s37, %s38
      %p49 = scmp.eq.s32.totalorder %s15, 0
      %p50 = por %p48, %p49
      %p51 = scmp.ne.s32.totalorder %s37, %s38
      %p52 = scmp.eq.s32.totalorder %s16, 5
      %p53 = por %p51, %p52
      %p55 = scmp.ne.s32.totalorder %s38, %s54
      %p56 = scmp.eq.s32.totalorder %s16, 0
      %p57 = por %p55, %p56
      %s58 = ssub.s32 %s17, %s29
      %s59 = ssub.s32 %s18, %s25
      %s60 = sor.u32 %s58, %s59
      %p61 = scmp.eq.s32.totalorder %s60, 0
      %s63 = sadd.s32 %s62, 1
      %s64 = scalar_select %p61, %s62, %s63
      %p67 = pneg %p61
      %p68 = scmp.eq.s32.totalorder %s10, 5
      %p69 = por %p67, %p68
      %p70 = scmp.ne.s32.totalorder %s62, %s65
      %p71 = scmp.eq.s32.totalorder %s10, 0
      %p72 = por %p70, %p71
      %p73 = scmp.ne.s32.totalorder %s62, %s65
      %p74 = scmp.eq.s32.totalorder %s15, 5
      %p75 = por %p73, %p74
      %p76 = scmp.ne.s32.totalorder %s65, %s66
      %p77 = scmp.eq.s32.totalorder %s15, 0
      %p78 = por %p76, %p77
      %p79 = scmp.ne.s32.totalorder %s65, %s66
      %p80 = scmp.eq.s32.totalorder %s16, 5
      %p81 = por %p79, %p80
      %p83 = scmp.ne.s32.totalorder %s66, %s82
      %p84 = scmp.eq.s32.totalorder %s16, 0
      %p85 = por %p83, %p84
      %p86 = scmp.le.s32.totalorder 1, %s10
      %p87 = scmp.lt.s32.totalorder %s10, 7
      %p88 = pnand %p86, %p87
      %p89 = pneg %p88
      // Predicated region
      $region9: #{displacement_regularizer_3d.1} parent=5 // pred_check
        _
      $region10: #{displacement_regularizer_3d.1} parent=5 // pred_check_branch
        %91 = sbr.rel (%p88) target = $region12
      $region11: #{displacement_regularizer_3d.1} parent=5 // pred_region
        %s92 = ssub.s32 %s10, 1
      $region12: #{displacement_regularizer_3d.1} parent=5 // pred_fallthru
        _
      %p93 = scmp.lt.s32.totalorder %s10, 6
      // Predicated region
      $region13: #{displacement_regularizer_3d.1} parent=5 // pred_check
        %p94 = pneg %p93
      $region14: #{displacement_regularizer_3d.1} parent=5 // pred_check_branch
        %96 = sbr.rel (%p94) target = $region16
      $region15: #{displacement_regularizer_3d.1} parent=5 // pred_region
        // Predicated region
        $region17: #{displacement_regularizer_3d.1} parent=15 // pred_check
          %p97 = pneg %p44
        $region18: #{displacement_regularizer_3d.1} parent=15 // pred_check_branch
          %99 = sbr.rel (%p97) target = $region20
        $region19: #{displacement_regularizer_3d.1} parent=15 // pred_region
          %s100 = sand.u32 %s34, 1
          %s101 = scalar_lea.sflag [#allocation3], %s100
          %s102 = sand.u32 %s34, 1
          %s103 = smul.addr %s102, 128
          %s104 = scalar_lea.vmem [#allocation2], %s103
          %s106 = ssub.s32 2048, 2048
          %107 = vsyncadd %s101, %s106
          %s108 = smul.addr %s18, 16
          %s109 = smul.addr %s17, 48
          %s110 = sadd.s32 %s108, %s109
          %s111 = smul.addr %s110, 128
          %s112 = scalar_lea.hbm %s0, %s111
          %s113 = sshll.u32 %s104, 4
          %s114 = int_to_ptr.vmem [resolvable:$true] %s113
          %119 = dma.hbm_to_vmem [thread:$0]  %s112, 2048, %s114, %s101, 128, 128, 8
        $region20: #{displacement_regularizer_3d.1} parent=15 // pred_fallthru
          _
      $region16: #{displacement_regularizer_3d.1} parent=5 // pred_fallthru
        _
      %p120 = scmp.le.s32.totalorder 1, %s10
      %p121 = scmp.lt.s32.totalorder %s10, 7
      %p122 = pnand %p120, %p121
      %p123 = pneg %p122
      // Predicated region
      $region21: #{displacement_regularizer_3d.1} parent=5 // pred_check
        _
      $region22: #{displacement_regularizer_3d.1} parent=5 // pred_check_branch
        %125 = sbr.rel (%p122) target = $region24
      $region23: #{displacement_regularizer_3d.1} parent=5 // pred_region
        %s126 = ssub.s32 %s10, 1
        %s127 = sand.u32 %s37, 1
        %s128 = scalar_lea.sflag [#allocation3], %s127
        %s129 = sand.u32 %s37, 1
        %s130 = smul.addr %s129, 128
        %s131 = scalar_lea.vmem [#allocation2], %s130
        // Predicated region
        $region25: #{displacement_regularizer_3d.1} parent=23 // pred_check
          %p132 = pneg %p50
        $region26: #{displacement_regularizer_3d.1} parent=23 // pred_check_branch
          %134 = sbr.rel (%p132) target = $region28
        $region27: #{displacement_regularizer_3d.1} parent=23 // pred_region
          %135 = dma.done %s128, 2048
        $region28: #{displacement_regularizer_3d.1} parent=23 // pred_fallthru
          _
        %s136 = sand.u32 %s37, 1
        %s137 = scalar_lea.sflag [#allocation3], %s136
        %s138 = sand.u32 %s37, 1
        %s139 = smul.addr %s138, 128
        %s140 = scalar_lea.vmem [#allocation2], %s139
        %p141 = pneg %p50
        %p142 = pneg %p47
        %p143 = pneg %p78
        %p144 = pneg %p75
        %p145 = scmp.lt.s32.totalorder %s19, 1
        %s146 = scalar_select %p145, %s19, 1
        %p147 = scmp.lt.s32.totalorder %s20, 2
        %s148 = scalar_select %p147, %s20, 2
        %s149 = smul.addr %s148, 2
        %s150 = smul.addr %s146, 6
        %s151 = sadd.s32 %s149, %s150
        %s152 = smul.addr %s151, 8
        %s153 = scalar_lea.vmem %s1, %s152
        %p154 = scmp.lt.s32.totalorder %s19, 1
        %s155 = scalar_select %p154, %s19, 1
        %p156 = scmp.lt.s32.totalorder %s20, 2
        %s157 = scalar_select %p156, %s20, 2
        %s158 = smul.addr %s157, 2
        %s159 = smul.addr %s155, 6
        %s160 = sadd.s32 %s158, %s159
        %s161 = smul.addr %s160, 8
        %s162 = scalar_lea.vmem %s1, %s161
        %v163 = vld [vmem:[%s131] sm:$0xff]
        %v164 = vld [vmem:[%s131 + $0x8] sm:$0xff]
        %v165 = vld [vmem:[%s131 + $0x10] sm:$0xff]
        %v166 = vld [vmem:[%s131 + $0x18] sm:$0xff]
        %v167 = vld [vmem:[%s131 + $0x20] sm:$0xff]
        %v168 = vld [vmem:[%s131 + $0x28] sm:$0xff]
        %v169 = vld [vmem:[%s131 + $0x30] sm:$0xff]
        %v170 = vld [vmem:[%s131 + $0x38] sm:$0xff]
        %v171 = vld [vmem:[%s131 + $0x40] sm:$0xff]
        %v172 = vld [vmem:[%s131 + $0x48] sm:$0xff]
        %v173 = vld [vmem:[%s131 + $0x50] sm:$0xff]
        %v174 = vld [vmem:[%s131 + $0x58] sm:$0xff]
        %v175 = vld [vmem:[%s131 + $0x60] sm:$0xff]
        %v176 = vld [vmem:[%s131 + $0x68] sm:$0xff]
        %v177 = vld [vmem:[%s131 + $0x70] sm:$0xff]
        %v178 = vld [vmem:[%s131 + $0x78] sm:$0xff]
        %v179 = vadd.f32 %v171, %v163
        %v180 = vadd.f32 %v172, %v164
        %v181 = vadd.f32 %v173, %v165
        %v182 = vadd.f32 %v174, %v166
        %v183 = vadd.f32 %v175, %v167
        %v184 = vadd.f32 %v176, %v168
        %v185 = vadd.f32 %v177, %v169
        %v186 = vadd.f32 %v178, %v170
        %v187 = vmul.f32 %v167, 2.0
        %v188 = vmul.f32 %v168, 2.0
        %v189 = vmul.f32 %v169, 2.0
        %v190 = vmul.f32 %v170, 2.0
        %v191 = vmul.f32 %v171, 2.0
        %v192 = vmul.f32 %v172, 2.0
        %v193 = vmul.f32 %v173, 2.0
        %v194 = vmul.f32 %v174, 2.0
        %v195 = vsub.f32 %v179, %v187
        %v196 = vsub.f32 %v180, %v188
        %v197 = vsub.f32 %v181, %v189
        %v198 = vsub.f32 %v182, %v190
        %v199 = vsub.f32 %v183, %v191
        %v200 = vsub.f32 %v184, %v192
        %v201 = vsub.f32 %v185, %v193
        %v202 = vsub.f32 %v186, %v194
        %v203 = vmul.f32 %v195, 0.25
        %v204 = vmul.f32 %v196, 0.25
        %v205 = vmul.f32 %v197, 0.25
        %v206 = vmul.f32 %v198, 0.25
        %v207 = vmul.f32 %v199, 0.25
        %v208 = vmul.f32 %v200, 0.25
        %v209 = vmul.f32 %v201, 0.25
        %v210 = vmul.f32 %v202, 0.25
        %v211 = vmul.f32 %v203, %v203
        %v212 = vmul.f32 %v204, %v204
        %v213 = vmul.f32 %v205, %v205
        %v214 = vmul.f32 %v206, %v206
        %v215 = vmul.f32 %v207, %v207
        %v216 = vmul.f32 %v208, %v208
        %v217 = vmul.f32 %v209, %v209
        %v218 = vmul.f32 %v210, %v210
        %v219 = vrot.slane %v167, 6
        %v220 = vrot.slane %v169, 6
        %v221 = vrot.slane %v171, 6
        %v222 = vrot.slane %v173, 6
        %v223 = vrot.slane %v168, 6
        %v224 = vrot.slane %v170, 6
        %v225 = vrot.slane %v172, 6
        %v226 = vrot.slane %v174, 6
        %v227 = vlaneseq
        %v228 = vshrl.u32 %v227, 7
        %vm229 = vcmp.lt.s32.totalorder %v228, 2
        %v230 = vsel %vm229, %v219, %v223
        %v231 = vsel %vm229, %v220, %v224
        %v232 = vsel %vm229, %v221, %v225
        %v233 = vsel %vm229, %v222, %v226
        %v234 = vsel %vm229, %v223, %v219
        %v235 = vsel %vm229, %v224, %v220
        %v236 = vsel %vm229, %v225, %v221
        %v237 = vsel %vm229, %v226, %v222
        %v238 = vrot.slane %v167, 2
        %v239 = vrot.slane %v169, 2
        %v240 = vrot.slane %v171, 2
        %v241 = vrot.slane %v173, 2
        %v242 = vrot.slane %v168, 2
        %v243 = vrot.slane %v170, 2
        %v244 = vrot.slane %v172, 2
        %v245 = vrot.slane %v174, 2
        %vm246 = vcmp.lt.s32.totalorder %v228, 6
        %v247 = vsel %vm246, %v238, %v242
        %v248 = vsel %vm246, %v239, %v243
        %v249 = vsel %vm246, %v240, %v244
        %v250 = vsel %vm246, %v241, %v245
        %v251 = vsel %vm246, %v242, %v238
        %v252 = vsel %vm246, %v243, %v239
        %v253 = vsel %vm246, %v244, %v240
        %v254 = vsel %vm246, %v245, %v241
        %v255 = vadd.f32 %v234, %v247
        %v256 = vadd.f32 %v230, %v251
        %v257 = vadd.f32 %v235, %v248
        %v258 = vadd.f32 %v231, %v252
        %v259 = vadd.f32 %v236, %v249
        %v260 = vadd.f32 %v232, %v253
        %v261 = vadd.f32 %v237, %v250
        %v262 = vadd.f32 %v233, %v254
        %v263 = vsub.f32 %v255, %v187
        %v264 = vsub.f32 %v256, %v188
        %v265 = vsub.f32 %v257, %v189
        %v266 = vsub.f32 %v258, %v190
        %v267 = vsub.f32 %v259, %v191
        %v268 = vsub.f32 %v260, %v192
        %v269 = vsub.f32 %v261, %v193
        %v270 = vsub.f32 %v262, %v194
        %v271 = vmul.f32 %v263, 0.25
        %v272 = vmul.f32 %v264, 0.25
        %v273 = vmul.f32 %v265, 0.25
        %v274 = vmul.f32 %v266, 0.25
        %v275 = vmul.f32 %v267, 0.25
        %v276 = vmul.f32 %v268, 0.25
        %v277 = vmul.f32 %v269, 0.25
        %v278 = vmul.f32 %v270, 0.25
        %v279 = vmul.f32 %v271, %v271
        %v280 = vmul.f32 %v272, %v272
        %v281 = vmul.f32 %v273, %v273
        %v282 = vmul.f32 %v274, %v274
        %v283 = vmul.f32 %v275, %v275
        %v284 = vmul.f32 %v276, %v276
        %v285 = vmul.f32 %v277, %v277
        %v286 = vmul.f32 %v278, %v278
        %v287 = vadd.f32 %v211, %v279
        %v288 = vadd.f32 %v212, %v280
        %v289 = vadd.f32 %v213, %v281
        %v290 = vadd.f32 %v214, %v282
        %v291 = vadd.f32 %v215, %v283
        %v292 = vadd.f32 %v216, %v284
        %v293 = vadd.f32 %v217, %v285
        %v294 = vadd.f32 %v218, %v286
        %295 = vrot.lane.b32.xlu0 %v167, 2
        %v296 = vpop.permute.xlu0 %295
        %297 = vrot.lane.b32.xlu0 %v168, 2
        %v298 = vpop.permute.xlu0 %297
        %299 = vrot.lane.b32.xlu0 %v169, 2
        %v300 = vpop.permute.xlu0 %299
        %301 = vrot.lane.b32.xlu0 %v170, 2
        %v302 = vpop.permute.xlu0 %301
        %303 = vrot.lane.b32.xlu0 %v171, 2
        %v304 = vpop.permute.xlu0 %303
        %305 = vrot.lane.b32.xlu0 %v172, 2
        %v306 = vpop.permute.xlu0 %305
        %307 = vrot.lane.b32.xlu0 %v173, 2
        %v308 = vpop.permute.xlu0 %307
        %309 = vrot.lane.b32.xlu0 %v174, 2
        %v310 = vpop.permute.xlu0 %309
        %311 = vrot.lane.b32.xlu0 %v167, 126
        %v312 = vpop.permute.xlu0 %311
        %313 = vrot.lane.b32.xlu0 %v168, 126
        %v314 = vpop.permute.xlu0 %313
        %315 = vrot.lane.b32.xlu0 %v169, 126
        %v316 = vpop.permute.xlu0 %315
        %317 = vrot.lane.b32.xlu0 %v170, 126
        %v318 = vpop.permute.xlu0 %317
        %319 = vrot.lane.b32.xlu0 %v171, 126
        %v320 = vpop.permute.xlu0 %319
        %321 = vrot.lane.b32.xlu0 %v172, 126
        %v322 = vpop.permute.xlu0 %321
        %323 = vrot.lane.b32.xlu0 %v173, 126
        %v324 = vpop.permute.xlu0 %323
        %325 = vrot.lane.b32.xlu0 %v174, 126
        %v326 = vpop.permute.xlu0 %325
        %v327 = vadd.f32 %v296, %v312
        %v328 = vadd.f32 %v298, %v314
        %v329 = vadd.f32 %v300, %v316
        %v330 = vadd.f32 %v302, %v318
        %v331 = vadd.f32 %v304, %v320
        %v332 = vadd.f32 %v306, %v322
        %v333 = vadd.f32 %v308, %v324
        %v334 = vadd.f32 %v310, %v326
        %v335 = vsub.f32 %v327, %v187
        %v336 = vsub.f32 %v328, %v188
        %v337 = vsub.f32 %v329, %v189
        %v338 = vsub.f32 %v330, %v190
        %v339 = vsub.f32 %v331, %v191
        %v340 = vsub.f32 %v332, %v192
        %v341 = vsub.f32 %v333, %v193
        %v342 = vsub.f32 %v334, %v194
        %v343 = vmul.f32 %v335, 0.25
        %v344 = vmul.f32 %v336, 0.25
        %v345 = vmul.f32 %v337, 0.25
        %v346 = vmul.f32 %v338, 0.25
        %v347 = vmul.f32 %v339, 0.25
        %v348 = vmul.f32 %v340, 0.25
        %v349 = vmul.f32 %v341, 0.25
        %v350 = vmul.f32 %v342, 0.25
        %v351 = vmul.f32 %v343, %v343
        %v352 = vmul.f32 %v344, %v344
        %v353 = vmul.f32 %v345, %v345
        %v354 = vmul.f32 %v346, %v346
        %v355 = vmul.f32 %v347, %v347
        %v356 = vmul.f32 %v348, %v348
        %v357 = vmul.f32 %v349, %v349
        %v358 = vmul.f32 %v350, %v350
        %v359 = vadd.f32 %v287, %v351
        %v360 = vadd.f32 %v288, %v352
        %v361 = vadd.f32 %v289, %v353
        %v362 = vadd.f32 %v290, %v354
        %v363 = vadd.f32 %v291, %v355
        %v364 = vadd.f32 %v292, %v356
        %v365 = vadd.f32 %v293, %v357
        %v366 = vadd.f32 %v294, %v358
        %v367 = vsub.f32 %v169, %v165
        %v368 = vsub.f32 %v170, %v166
        %v369 = vsub.f32 %v171, %v167
        %v370 = vsub.f32 %v172, %v168
        %v371 = vsub.f32 %v173, %v169
        %v372 = vsub.f32 %v174, %v170
        %v373 = vsub.f32 %v175, %v171
        %v374 = vsub.f32 %v176, %v172
        %v375 = vrot.slane %v367, 7
        %v376 = vrot.slane %v369, 7
        %v377 = vrot.slane %v371, 7
        %v378 = vrot.slane %v373, 7
        %v379 = vrot.slane %v368, 7
        %v380 = vrot.slane %v370, 7
        %v381 = vrot.slane %v372, 7
        %v382 = vrot.slane %v374, 7
        %vm383 = vcmp.lt.s32.totalorder %v228, 1
        %v384 = vsel %vm383, %v375, %v379
        %v385 = vsel %vm383, %v376, %v380
        %v386 = vsel %vm383, %v377, %v381
        %v387 = vsel %vm383, %v378, %v382
        %v388 = vsel %vm383, %v379, %v375
        %v389 = vsel %vm383, %v380, %v376
        %v390 = vsel %vm383, %v381, %v377
        %v391 = vsel %vm383, %v382, %v378
        %v392 = vrot.slane %v367, 1
        %v393 = vrot.slane %v369, 1
        %v394 = vrot.slane %v371, 1
        %v395 = vrot.slane %v373, 1
        %v396 = vrot.slane %v368, 1
        %v397 = vrot.slane %v370, 1
        %v398 = vrot.slane %v372, 1
        %v399 = vrot.slane %v374, 1
        %vm400 = vcmp.lt.s32.totalorder %v228, 7
        %v401 = vsel %vm400, %v392, %v396
        %v402 = vsel %vm400, %v393, %v397
        %v403 = vsel %vm400, %v394, %v398
        %v404 = vsel %vm400, %v395, %v399
        %v405 = vsel %vm400, %v396, %v392
        %v406 = vsel %vm400, %v397, %v393
        %v407 = vsel %vm400, %v398, %v394
        %v408 = vsel %vm400, %v399, %v395
        %v409 = vsub.f32 %v388, %v401
        %v410 = vsub.f32 %v384, %v405
        %v411 = vsub.f32 %v389, %v402
        %v412 = vsub.f32 %v385, %v406
        %v413 = vsub.f32 %v390, %v403
        %v414 = vsub.f32 %v386, %v407
        %v415 = vsub.f32 %v391, %v404
        %v416 = vsub.f32 %v387, %v408
        %v417 = vmul.f32 %v409, 0.25
        %v418 = vmul.f32 %v410, 0.25
        %v419 = vmul.f32 %v411, 0.25
        %v420 = vmul.f32 %v412, 0.25
        %v421 = vmul.f32 %v413, 0.25
        %v422 = vmul.f32 %v414, 0.25
        %v423 = vmul.f32 %v415, 0.25
        %v424 = vmul.f32 %v416, 0.25
        %v425 = vmul.f32 %v417, %v417
        %v426 = vmul.f32 %v418, %v418
        %v427 = vmul.f32 %v419, %v419
        %v428 = vmul.f32 %v420, %v420
        %v429 = vmul.f32 %v421, %v421
        %v430 = vmul.f32 %v422, %v422
        %v431 = vmul.f32 %v423, %v423
        %v432 = vmul.f32 %v424, %v424
        %v433 = vmul.f32 %v425, 2.0
        %v434 = vmul.f32 %v426, 2.0
        %v435 = vmul.f32 %v427, 2.0
        %v436 = vmul.f32 %v428, 2.0
        %v437 = vmul.f32 %v429, 2.0
        %v438 = vmul.f32 %v430, 2.0
        %v439 = vmul.f32 %v431, 2.0
        %v440 = vmul.f32 %v432, 2.0
        %v441 = vadd.f32 %v359, %v433
        %v442 = vadd.f32 %v360, %v434
        %v443 = vadd.f32 %v361, %v435
        %v444 = vadd.f32 %v362, %v436
        %v445 = vadd.f32 %v363, %v437
        %v446 = vadd.f32 %v364, %v438
        %v447 = vadd.f32 %v365, %v439
        %v448 = vadd.f32 %v366, %v440
        %449 = vrot.lane.b32.xlu0 %v367, 1
        %v450 = vpop.permute.xlu0 %449
        %451 = vrot.lane.b32.xlu0 %v368, 1
        %v452 = vpop.permute.xlu0 %451
        %453 = vrot.lane.b32.xlu0 %v369, 1
        %v454 = vpop.permute.xlu0 %453
        %455 = vrot.lane.b32.xlu0 %v370, 1
        %v456 = vpop.permute.xlu0 %455
        %457 = vrot.lane.b32.xlu0 %v371, 1
        %v458 = vpop.permute.xlu0 %457
        %459 = vrot.lane.b32.xlu0 %v372, 1
        %v460 = vpop.permute.xlu0 %459
        %461 = vrot.lane.b32.xlu0 %v373, 1
        %v462 = vpop.permute.xlu0 %461
        %463 = vrot.lane.b32.xlu0 %v374, 1
        %v464 = vpop.permute.xlu0 %463
        %465 = vrot.lane.b32.xlu0 %v367, 127
        %v466 = vpop.permute.xlu0 %465
        %467 = vrot.lane.b32.xlu0 %v368, 127
        %v468 = vpop.permute.xlu0 %467
        %469 = vrot.lane.b32.xlu0 %v369, 127
        %v470 = vpop.permute.xlu0 %469
        %471 = vrot.lane.b32.xlu0 %v370, 127
        %v472 = vpop.permute.xlu0 %471
        %473 = vrot.lane.b32.xlu0 %v371, 127
        %v474 = vpop.permute.xlu0 %473
        %475 = vrot.lane.b32.xlu0 %v372, 127
        %v476 = vpop.permute.xlu0 %475
        %477 = vrot.lane.b32.xlu0 %v373, 127
        %v478 = vpop.permute.xlu0 %477
        %479 = vrot.lane.b32.xlu0 %v374, 127
        %v480 = vpop.permute.xlu0 %479
        %v481 = vsub.f32 %v450, %v466
        %v482 = vsub.f32 %v452, %v468
        %v483 = vsub.f32 %v454, %v470
        %v484 = vsub.f32 %v456, %v472
        %v485 = vsub.f32 %v458, %v474
        %v486 = vsub.f32 %v460, %v476
        %v487 = vsub.f32 %v462, %v478
        %v488 = vsub.f32 %v464, %v480
        %v489 = vmul.f32 %v481, 0.25
        %v490 = vmul.f32 %v482, 0.25
        %v491 = vmul.f32 %v483, 0.25
        %v492 = vmul.f32 %v484, 0.25
        %v493 = vmul.f32 %v485, 0.25
        %v494 = vmul.f32 %v486, 0.25
        %v495 = vmul.f32 %v487, 0.25
        %v496 = vmul.f32 %v488, 0.25
        %v497 = vmul.f32 %v489, %v489
        %v498 = vmul.f32 %v490, %v490
        %v499 = vmul.f32 %v491, %v491
        %v500 = vmul.f32 %v492, %v492
        %v501 = vmul.f32 %v493, %v493
        %v502 = vmul.f32 %v494, %v494
        %v503 = vmul.f32 %v495, %v495
        %v504 = vmul.f32 %v496, %v496
        %v505 = vmul.f32 %v497, 2.0
        %v506 = vmul.f32 %v498, 2.0
        %v507 = vmul.f32 %v499, 2.0
        %v508 = vmul.f32 %v500, 2.0
        %v509 = vmul.f32 %v501, 2.0
        %v510 = vmul.f32 %v502, 2.0
        %v511 = vmul.f32 %v503, 2.0
        %v512 = vmul.f32 %v504, 2.0
        %v513 = vadd.f32 %v441, %v505
        %v514 = vadd.f32 %v442, %v506
        %v515 = vadd.f32 %v443, %v507
        %v516 = vadd.f32 %v444, %v508
        %v517 = vadd.f32 %v445, %v509
        %v518 = vadd.f32 %v446, %v510
        %v519 = vadd.f32 %v447, %v511
        %v520 = vadd.f32 %v448, %v512
        %v521 = vrot.slane %v167, 7
        %v522 = vrot.slane %v169, 7
        %v523 = vrot.slane %v171, 7
        %v524 = vrot.slane %v173, 7
        %v525 = vrot.slane %v168, 7
        %v526 = vrot.slane %v170, 7
        %v527 = vrot.slane %v172, 7
        %v528 = vrot.slane %v174, 7
        %v529 = vsel %vm383, %v521, %v525
        %v530 = vsel %vm383, %v522, %v526
        %v531 = vsel %vm383, %v523, %v527
        %v532 = vsel %vm383, %v524, %v528
        %v533 = vsel %vm383, %v525, %v521
        %v534 = vsel %vm383, %v526, %v522
        %v535 = vsel %vm383, %v527, %v523
        %v536 = vsel %vm383, %v528, %v524
        %v537 = vrot.slane %v167, 1
        %v538 = vrot.slane %v169, 1
        %v539 = vrot.slane %v171, 1
        %v540 = vrot.slane %v173, 1
        %v541 = vrot.slane %v168, 1
        %v542 = vrot.slane %v170, 1
        %v543 = vrot.slane %v172, 1
        %v544 = vrot.slane %v174, 1
        %v545 = vsel %vm400, %v537, %v541
        %v546 = vsel %vm400, %v538, %v542
        %v547 = vsel %vm400, %v539, %v543
        %v548 = vsel %vm400, %v540, %v544
        %v549 = vsel %vm400, %v541, %v537
        %v550 = vsel %vm400, %v542, %v538
        %v551 = vsel %vm400, %v543, %v539
        %v552 = vsel %vm400, %v544, %v540
        %v553 = vsub.f32 %v533, %v545
        %v554 = vsub.f32 %v529, %v549
        %v555 = vsub.f32 %v534, %v546
        %v556 = vsub.f32 %v530, %v550
        %v557 = vsub.f32 %v535, %v547
        %v558 = vsub.f32 %v531, %v551
        %v559 = vsub.f32 %v536, %v548
        %v560 = vsub.f32 %v532, %v552
        %561 = vrot.lane.b32.xlu0 %v553, 1
        %v562 = vpop.permute.xlu0 %561
        %563 = vrot.lane.b32.xlu0 %v554, 1
        %v564 = vpop.permute.xlu0 %563
        %565 = vrot.lane.b32.xlu0 %v555, 1
        %v566 = vpop.permute.xlu0 %565
        %567 = vrot.lane.b32.xlu0 %v556, 1
        %v568 = vpop.permute.xlu0 %567
        %569 = vrot.lane.b32.xlu0 %v557, 1
        %v570 = vpop.permute.xlu0 %569
        %571 = vrot.lane.b32.xlu0 %v558, 1
        %v572 = vpop.permute.xlu0 %571
        %573 = vrot.lane.b32.xlu0 %v559, 1
        %v574 = vpop.permute.xlu0 %573
        %575 = vrot.lane.b32.xlu0 %v560, 1
        %v576 = vpop.permute.xlu0 %575
        %577 = vrot.lane.b32.xlu0 %v553, 127
        %v578 = vpop.permute.xlu0 %577
        %579 = vrot.lane.b32.xlu0 %v554, 127
        %v580 = vpop.permute.xlu0 %579
        %581 = vrot.lane.b32.xlu0 %v555, 127
        %v582 = vpop.permute.xlu0 %581
        %583 = vrot.lane.b32.xlu0 %v556, 127
        %v584 = vpop.permute.xlu0 %583
        %585 = vrot.lane.b32.xlu0 %v557, 127
        %v586 = vpop.permute.xlu0 %585
        %587 = vrot.lane.b32.xlu0 %v558, 127
        %v588 = vpop.permute.xlu0 %587
        %589 = vrot.lane.b32.xlu0 %v559, 127
        %v590 = vpop.permute.xlu0 %589
        %591 = vrot.lane.b32.xlu0 %v560, 127
        %v592 = vpop.permute.xlu0 %591
        %v593 = vsub.f32 %v562, %v578
        %v594 = vsub.f32 %v564, %v580
        %v595 = vsub.f32 %v566, %v582
        %v596 = vsub.f32 %v568, %v584
        %v597 = vsub.f32 %v570, %v586
        %v598 = vsub.f32 %v572, %v588
        %v599 = vsub.f32 %v574, %v590
        %v600 = vsub.f32 %v576, %v592
        %v601 = vmul.f32 %v593, 0.25
        %v602 = vmul.f32 %v594, 0.25
        %v603 = vmul.f32 %v595, 0.25
        %v604 = vmul.f32 %v596, 0.25
        %v605 = vmul.f32 %v597, 0.25
        %v606 = vmul.f32 %v598, 0.25
        %v607 = vmul.f32 %v599, 0.25
        %v608 = vmul.f32 %v600, 0.25
        %v609 = vmul.f32 %v601, %v601
        %v610 = vmul.f32 %v602, %v602
        %v611 = vmul.f32 %v603, %v603
        %v612 = vmul.f32 %v604, %v604
        %v613 = vmul.f32 %v605, %v605
        %v614 = vmul.f32 %v606, %v606
        %v615 = vmul.f32 %v607, %v607
        %v616 = vmul.f32 %v608, %v608
        %v617 = vmul.f32 %v609, 2.0
        %v618 = vmul.f32 %v610, 2.0
        %v619 = vmul.f32 %v611, 2.0
        %v620 = vmul.f32 %v612, 2.0
        %v621 = vmul.f32 %v613, 2.0
        %v622 = vmul.f32 %v614, 2.0
        %v623 = vmul.f32 %v615, 2.0
        %v624 = vmul.f32 %v616, 2.0
        %v625 = vadd.f32 %v513, %v617
        %v626 = vadd.f32 %v514, %v618
        %v627 = vadd.f32 %v515, %v619
        %v628 = vadd.f32 %v516, %v620
        %v629 = vadd.f32 %v517, %v621
        %v630 = vadd.f32 %v518, %v622
        %v631 = vadd.f32 %v519, %v623
        %v632 = vadd.f32 %v520, %v624
        %v633 = vadd.f32 %v625, %v627
        %v634 = vadd.f32 %v633, %v629
        %v635 = vadd.f32 %v634, %v631
        %v636 = vadd.f32 %v626, %v628
        %v637 = vadd.f32 %v636, %v630
        %v638 = vadd.f32 %v637, %v632
        %v639 = vadd.s32 %v228, 8
        %v640 = vlaneseq
        %v641 = vand.u32 %v640, 127
        %vm642 = vcmp.ge.s32.totalorder %v228, 2
        %vm643 = vcmp.ge.s32.totalorder %v639, 2
        %vm644 = vcmp.le.s32.totalorder %v228, 13
        %vm645 = vcmp.le.s32.totalorder %v639, 13
        %vm646 = vmand %vm642, %vm644
        %vm647 = vmand %vm643, %vm645
        %vm648 = vcmp.ge.s32.totalorder %v641, 2
        %vm649 = vmand %vm646, %vm648
        %vm650 = vmand %vm647, %vm648
        %vm651 = vcmp.le.s32.totalorder %v641, 125
        %vm652 = vmand %vm649, %vm651
        %vm653 = vmand %vm650, %vm651
        %v654 = vsel %vm652, %v635, 0.0
        %v655 = vsel %vm653, %v638, 0.0
        %656 = vst [vmem:[%s162] sm:$0xff] %v654
        %657 = vst [vmem:[%s162 + $0x8] sm:$0xff] %v655
        %p658 = scmp.lt.s32.totalorder %s19, 1
        %s659 = scalar_select %p658, %s19, 1
        %p660 = scmp.lt.s32.totalorder %s20, 2
        %s661 = scalar_select %p660, %s20, 2
        %s662 = smul.addr %s661, 2
        %s663 = smul.addr %s659, 6
        %s664 = sadd.s32 %s662, %s663
        %s665 = smul.addr %s664, 8
        %s666 = scalar_lea.vmem %s1, %s665
        // Predicated region
        $region29: #{displacement_regularizer_3d.1} parent=23 // pred_check
          %p667 = pneg %p75
        $region30: #{displacement_regularizer_3d.1} parent=23 // pred_check_branch
          %669 = sbr.rel (%p667) target = $region32
        $region31: #{displacement_regularizer_3d.1} parent=23 // pred_region
          _
        $region32: #{displacement_regularizer_3d.1} parent=23 // pred_fallthru
          _
      $region24: #{displacement_regularizer_3d.1} parent=5 // pred_fallthru
        _
      %p670 = scmp.le.s32.totalorder 2, %s10
      // Predicated region
      $region33: #{displacement_regularizer_3d.1} parent=5 // pred_check
        %p671 = pneg %p670
      $region34: #{displacement_regularizer_3d.1} parent=5 // pred_check_branch
        %673 = sbr.rel (%p671) target = $region36
      $region35: #{displacement_regularizer_3d.1} parent=5 // pred_region
        %s674 = ssub.s32 %s10, 2
        // Predicated region
        $region37: #{displacement_regularizer_3d.1} parent=35 // pred_check
          %p675 = pneg %p81
        $region38: #{displacement_regularizer_3d.1} parent=35 // pred_check_branch
          %677 = sbr.rel (%p675) target = $region40
        $region39: #{displacement_regularizer_3d.1} parent=35 // pred_region
          %p678 = scmp.lt.s32.totalorder %s21, 1
          %s679 = scalar_select %p678, %s21, 1
          %p680 = scmp.lt.s32.totalorder %s22, 2
          %s681 = scalar_select %p680, %s22, 2
          %s682 = smul.addr %s681, 2
          %s683 = smul.addr %s679, 6
          %s684 = sadd.s32 %s682, %s683
          %s685 = smul.addr %s684, 8
          %s686 = scalar_lea.vmem %s1, %s685
        $region40: #{displacement_regularizer_3d.1} parent=35 // pred_fallthru
          _
      $region36: #{displacement_regularizer_3d.1} parent=5 // pred_fallthru
        _
    $region6: #{displacement_regularizer_3d.1} parent=1 // loop_footer
      %s14 = sadd.s32 1, %s10
    $region7: #{displacement_regularizer_3d.1} parent=1 // loop_footer_branch
      %9 = sbr.rel target = $region3
    $region8: #{displacement_regularizer_3d.1} parent=1 // loop_exit
      _
    %687 = vsyncpa [#allocation3], 1
    %s688 = scalar_lea.sflag [#allocation3], 1
    %689 = vsyncpa %s688, 1

</llo_original>
